<compile_context>
chip_gen: v7x
topology: tpu7x:2x2x1
jax: 0.10.0
libtpu: 0.0.40
codegen_flags: <defaults>
</compile_context>

<pallas_src>
import math

import jax
import jax.numpy as jnp
from jax.experimental import pallas as pl
from jax.experimental.pallas import tpu as pltpu


def _critic_kernel(xT_ref, w1_ref, b1_ref, w2_ref, b2_ref, w3_ref, b3_ref, o_ref):
    """Whole MLP for one batch tile; all intermediates are [H, T] (batch on lanes)."""
    hi = jax.lax.Precision.HIGHEST

    # fc1 + tanh:  [H, in] @ [in, T] -> [H, T]   (MXU matmul, EUP tanh)
    h1 = jnp.dot(w1_ref[...], xT_ref[...],
                 preferred_element_type=jnp.float32, precision=hi) + b1_ref[...]
    h1 = jnp.tanh(h1)

    # fc2 + tanh:  [H, H] @ [H, T] -> [H, T]
    h2 = jnp.dot(w2_ref[...], h1,
                 preferred_element_type=jnp.float32, precision=hi) + b2_ref[...]
    h2 = jnp.tanh(h2)

    # fc3 (out_features == 1): VPU multiply + XLU sublane reduction produces the
    # lane-dense [1, T] output row directly (no transpose, no degenerate N=1 matmul).
    v = jnp.sum(w3_ref[...] * h2, axis=0, keepdims=True) + b3_ref[0, 0]
    o_ref[...] = v.astype(o_ref.dtype)


def _choose_tiling(batch):
    """Pick (batch_tile, padded_batch); batch_tile is lane-aligned when tiled."""
    if batch <= 256:
        # Tiny problem: single tile covering the whole (unpadded) batch.
        return batch, batch
    if batch <= 8192:
        # Two tiles so the "parallel" grid axis can shard across v7x's two
        # TensorCores; costs one extra ~0.35us step on single-TC chips.
        padded = -(-batch // 256) * 256
        return padded // 2, padded
    # Very large batches: big lane-aligned tiles amortize the ~0.35us/step
    # pipeline overhead.  A 4096-row tile in the transposed layout is only a
    # few hundred KiB of VMEM.
    tile = 4096
    padded = -(-batch // tile) * tile
    return tile, padded


def critic_forward(x, params):
    """x: [B, num_inputs] float32 -> [B, 1] float32 values."""
    w1, b1, w2, b2, w3, b3 = params
    B, num_inputs = x.shape
    H = w1.shape[0]

    batch_tile, padded_B = _choose_tiling(B)

    # Batch-on-lanes layout plumbing: one transpose (+ optional zero pad) of the
    # tiny [B, num_inputs] input in the wrapper; everything downstream is
    # lane-dense.  Padded columns produce finite garbage and are sliced off.
    xT = jnp.transpose(x)
    if padded_B != B:
        xT = jnp.pad(xT, ((0, 0), (0, padded_B - B)))

    grid = (padded_B // batch_tile,)

    in_specs = [
        pl.BlockSpec((num_inputs, batch_tile), lambda i: (0, i)),   # x^T tile
        pl.BlockSpec((H, num_inputs), lambda i: (0, 0)),            # W1 [out, in]
        pl.BlockSpec((H, 1), lambda i: (0, 0)),                     # b1 column
        pl.BlockSpec((H, H), lambda i: (0, 0)),                     # W2 [out, in]
        pl.BlockSpec((H, 1), lambda i: (0, 0)),                     # b2 column
        pl.BlockSpec((H, 1), lambda i: (0, 0)),                     # W3 as a column
        pl.BlockSpec(memory_space=pltpu.MemorySpace.SMEM),          # b3 scalar
    ]
    # Lane-dense output: [1, padded_B] row, tiled along the lane axis.
    out_spec = pl.BlockSpec((1, batch_tile), lambda i: (0, i))

    out_row = pl.pallas_call(
        _critic_kernel,
        out_shape=jax.ShapeDtypeStruct((1, padded_B), jnp.float32),
        grid_spec=pltpu.PrefetchScalarGridSpec(
            num_scalar_prefetch=0,
            grid=grid,
            in_specs=in_specs,
            out_specs=out_spec,
        ),
        compiler_params=pltpu.CompilerParams(
            dimension_semantics=("parallel",),
        ),
    )(xT, w1, b1, w2, b2, w3, b3)

    # Wrapper-side layout plumbing back to the module's [B, 1] output
    # (drops any batch padding).
    return out_row[0, :B].reshape(B, 1)


def init_critic_params(key, num_inputs, hidden_size):
    """Deterministic init mirroring nn.Linear defaults (+ fc3 scaling).

    Layouts (kept close to PyTorch):
      w1: [H, num_inputs] (fc1.weight)   b1: [H, 1] (fc1.bias as column)
      w2: [H, H]          (fc2.weight)   b2: [H, 1]
      w3: [H, 1]          (fc3.weight^T) b3: [1, 1] (scalar, lives in SMEM)
    fc3: weight *= 0.1, bias *= 0.0 as in the PyTorch module.
    """
    k1, k2, k3, k4, k5, k6 = jax.random.split(key, 6)

    def uniform(k, shape, fan_in):
        bound = 1.0 / math.sqrt(fan_in)
        return jax.random.uniform(k, shape, jnp.float32, -bound, bound)

    w1 = uniform(k1, (hidden_size, num_inputs), num_inputs)
    b1 = uniform(k2, (hidden_size, 1), num_inputs)
    w2 = uniform(k3, (hidden_size, hidden_size), hidden_size)
    b2 = uniform(k4, (hidden_size, 1), hidden_size)
    w3 = uniform(k5, (hidden_size, 1), hidden_size) * 0.1
    b3 = uniform(k6, (1, 1), hidden_size) * 0.0
    return (w1, b1, w2, b2, w3, b3)


def _reference_forward(x, params):
    w1, b1, w2, b2, w3, b3 = params
    hi = jax.lax.Precision.HIGHEST
    h1 = jnp.tanh(jnp.dot(x, w1.T, precision=hi) + b1.T)
    h2 = jnp.tanh(jnp.dot(h1, w2.T, precision=hi) + b2.T)
    return jnp.dot(h2, w3, precision=hi) + b3


if __name__ == "__main__":
    NUM_INPUTS = 16   # state dim
    HIDDEN = 32       # args.hidden_size
    BATCH = 16

    key = jax.random.PRNGKey(0)
    k_params, k_x, k_x2 = jax.random.split(key, 3)

    params = init_critic_params(k_params, NUM_INPUTS, HIDDEN)

    # Small batch: single tile, no padding.
    x = jax.random.normal(k_x, (BATCH, NUM_INPUTS), jnp.float32)
    v = jax.block_until_ready(critic_forward(x, params))
    assert v.shape == (BATCH, 1)
    assert jnp.allclose(v, _reference_forward(x, params), atol=1e-4, rtol=1e-4)

    # Non-aligned larger batch: exercises zero-padding + the 2-tile grid path.
    x2 = jax.random.normal(k_x2, (300, NUM_INPUTS), jnp.float32)
    v2 = jax.block_until_ready(critic_forward(x2, params))
    assert v2.shape == (300, 1)
    assert jnp.allclose(v2, _reference_forward(x2, params), atol=1e-4, rtol=1e-4)

    print("KERNEL_OK")
</pallas_src>

<mosaic_0001>
module attributes {stable_mosaic.version = 11 : i64} {
  func.func @_critic_kernel(%arg0: i32, %arg1: memref<16x16xf32, #tpu.memory_space<vmem>>, %arg2: memref<32x16xf32, #tpu.memory_space<vmem>>, %arg3: memref<32x1xf32, #tpu.memory_space<vmem>>, %arg4: memref<32x32xf32, #tpu.memory_space<vmem>>, %arg5: memref<32x1xf32, #tpu.memory_space<vmem>>, %arg6: memref<32x1xf32, #tpu.memory_space<vmem>>, %arg7: memref<1x1xf32, #tpu.memory_space<smem>>, %arg8: memref<1x16xf32, #tpu.memory_space<vmem>>) attributes {dimension_semantics = [#tpu.dimension_semantics<parallel>], iteration_bounds = array<i64: 1>, scalar_prefetch = 0 : i64, scratch_operands = 0 : i64, tpu.core_type = #tpu.core_type<tc>, window_params = [{transform_indices = @transform_0, window_bounds = array<i64: 16, 16>}, {pipeline_mode = #tpu.pipeline_mode<synchronous>, transform_indices = @transform_1, window_bounds = array<i64: 32, 16>}, {pipeline_mode = #tpu.pipeline_mode<synchronous>, transform_indices = @transform_2, window_bounds = array<i64: 32, 1>}, {pipeline_mode = #tpu.pipeline_mode<synchronous>, transform_indices = @transform_3, window_bounds = array<i64: 32, 32>}, {pipeline_mode = #tpu.pipeline_mode<synchronous>, transform_indices = @transform_4, window_bounds = array<i64: 32, 1>}, {pipeline_mode = #tpu.pipeline_mode<synchronous>, transform_indices = @transform_5, window_bounds = array<i64: 32, 1>}, {transform_indices = @transform_6, window_bounds = array<i64: 1, 1>}, {transform_indices = @transform_7, window_bounds = array<i64: 1, 16>}]} {
    %c0 = arith.constant 0 : index
    %c0_0 = arith.constant 0 : index
    %0 = vector.load %arg2[%c0, %c0_0] : memref<32x16xf32, #tpu.memory_space<vmem>>, vector<32x16xf32>
    %c0_1 = arith.constant 0 : index
    %c0_2 = arith.constant 0 : index
    %1 = vector.load %arg1[%c0_1, %c0_2] : memref<16x16xf32, #tpu.memory_space<vmem>>, vector<16x16xf32>
    %cst = arith.constant dense<0.000000e+00> : vector<32x16xf32>
    %2 = tpu.matmul %0, %1, %cst {dimension_numbers = #tpu.dot_dimension_numbers<[1], [0], [0], [1], [0, 0, 1, 1], [], []>, precision = #tpu.contract_precision<fp32>} : vector<32x16xf32>, vector<16x16xf32>, vector<32x16xf32> -> vector<32x16xf32>
    %c0_3 = arith.constant 0 : index
    %c0_4 = arith.constant 0 : index
    %3 = vector.load %arg3[%c0_3, %c0_4] : memref<32x1xf32, #tpu.memory_space<vmem>>, vector<32x1xf32>
    %4 = vector.broadcast %3 : vector<32x1xf32> to vector<32x16xf32>
    %5 = arith.addf %2, %4 : vector<32x16xf32>
    %6 = math.tanh %5 : vector<32x16xf32>
    %c0_5 = arith.constant 0 : index
    %c0_6 = arith.constant 0 : index
    %7 = vector.load %arg4[%c0_5, %c0_6] : memref<32x32xf32, #tpu.memory_space<vmem>>, vector<32x32xf32>
    %cst_7 = arith.constant dense<0.000000e+00> : vector<32x16xf32>
    %8 = tpu.matmul %7, %6, %cst_7 {dimension_numbers = #tpu.dot_dimension_numbers<[1], [0], [0], [1], [0, 0, 1, 1], [], []>, precision = #tpu.contract_precision<fp32>} : vector<32x32xf32>, vector<32x16xf32>, vector<32x16xf32> -> vector<32x16xf32>
    %c0_8 = arith.constant 0 : index
    %c0_9 = arith.constant 0 : index
    %9 = vector.load %arg5[%c0_8, %c0_9] : memref<32x1xf32, #tpu.memory_space<vmem>>, vector<32x1xf32>
    %10 = vector.broadcast %9 : vector<32x1xf32> to vector<32x16xf32>
    %11 = arith.addf %8, %10 : vector<32x16xf32>
    %12 = math.tanh %11 : vector<32x16xf32>
    %c0_10 = arith.constant 0 : index
    %c0_11 = arith.constant 0 : index
    %13 = vector.load %arg6[%c0_10, %c0_11] : memref<32x1xf32, #tpu.memory_space<vmem>>, vector<32x1xf32>
    %14 = vector.broadcast %13 : vector<32x1xf32> to vector<32x16xf32>
    %15 = arith.mulf %14, %12 : vector<32x16xf32>
    %cst_12 = arith.constant dense<0.000000e+00> : vector<16xf32>
    %16 = vector.multi_reduction <add>, %15, %cst_12 [0] : vector<32x16xf32> to vector<16xf32>
    %17 = vector.shape_cast %16 : vector<16xf32> to vector<1x16xf32>
    %c0_13 = arith.constant 0 : index
    %c0_14 = arith.constant 0 : index
    %18 = memref.load %arg7[%c0_13, %c0_14] : memref<1x1xf32, #tpu.memory_space<smem>>
    %19 = vector.broadcast %18 : f32 to vector<1x16xf32>
    %20 = arith.addf %17, %19 : vector<1x16xf32>
    %c0_15 = arith.constant 0 : index
    %c0_16 = arith.constant 0 : index
    %21 = vector.load %arg8[%c0_15, %c0_16] : memref<1x16xf32, #tpu.memory_space<vmem>>, vector<1x16xf32>
    tpu.vector_store %arg8[%c0_15, %c0_16], %20 {strides = array<i32>} : memref<1x16xf32, #tpu.memory_space<vmem>>, vector<1x16xf32>,
    return
  }
  func.func @transform_0(%arg0: i32) -> (i32, i32) {
    %c0_i32 = arith.constant 0 : i32
    %c0_i32_0 = arith.constant 0 : i32
    return %c0_i32, %arg0 : i32, i32
  }
  func.func @transform_1(%arg0: i32) -> (i32, i32) {
    %c0_i32 = arith.constant 0 : i32
    %c0_i32_0 = arith.constant 0 : i32
    %c0_i32_1 = arith.constant 0 : i32
    return %c0_i32, %c0_i32_0 : i32, i32
  }
  func.func @transform_2(%arg0: i32) -> (i32, i32) {
    %c0_i32 = arith.constant 0 : i32
    %c0_i32_0 = arith.constant 0 : i32
    %c0_i32_1 = arith.constant 0 : i32
    return %c0_i32, %c0_i32_0 : i32, i32
  }
  func.func @transform_3(%arg0: i32) -> (i32, i32) {
    %c0_i32 = arith.constant 0 : i32
    %c0_i32_0 = arith.constant 0 : i32
    %c0_i32_1 = arith.constant 0 : i32
    return %c0_i32, %c0_i32_0 : i32, i32
  }
  func.func @transform_4(%arg0: i32) -> (i32, i32) {
    %c0_i32 = arith.constant 0 : i32
    %c0_i32_0 = arith.constant 0 : i32
    %c0_i32_1 = arith.constant 0 : i32
    return %c0_i32, %c0_i32_0 : i32, i32
  }
  func.func @transform_5(%arg0: i32) -> (i32, i32) {
    %c0_i32 = arith.constant 0 : i32
    %c0_i32_0 = arith.constant 0 : i32
    %c0_i32_1 = arith.constant 0 : i32
    return %c0_i32, %c0_i32_0 : i32, i32
  }
  func.func @transform_6(%arg0: i32) -> (i32, i32) {
    %c0_i32 = arith.constant 0 : i32
    %c0_i32_0 = arith.constant 0 : i32
    %c0_i32_1 = arith.constant 0 : i32
    return %c0_i32, %c0_i32_0 : i32, i32
  }
  func.func @transform_7(%arg0: i32) -> (i32, i32) {
    %c0_i32 = arith.constant 0 : i32
    %c0_i32_0 = arith.constant 0 : i32
    return %c0_i32, %arg0 : i32, i32
  }
}

</mosaic_0001>

<llo_original>
// kernel: tpu_custom_call.1
$region0: #{tpu_custom_call.1}
  #allocation0 [shape = 'u32[]', space=smem, size = 0x4, offset = 0x4, fixed_abs, tag = 'smem constant byte address 0x4 - core index']
  #allocation1 [shape = 'u32[144,128]{1,0:T(1,128)}', space=vmem, size = 0x12000, scoped, tag = 'internal scratch']
  #allocation2 [shape = 'f32[1,1]{1,0:T(1,128)S(6)}', space=smem, size = 0x200, scoped, tag = 'scoped memory for tpu_custom_call.1']
  %s0 = inlined_call_operand.vmem [shape: f32[16,16], index: 0, kind: input, shape index: {}]
  %s1 = inlined_call_operand.vmem [shape: f32[32,16], index: 1, kind: input, shape index: {}]
  %s2 = inlined_call_operand.vmem [shape: f32[32,1], index: 2, kind: input, shape index: {}]
  %s3 = inlined_call_operand.vmem [shape: f32[32,32], index: 3, kind: input, shape index: {}]
  %s4 = inlined_call_operand.vmem [shape: f32[32,1], index: 4, kind: input, shape index: {}]
  %s5 = inlined_call_operand.vmem [shape: f32[32,1], index: 5, kind: input, shape index: {}]
  %s6 = inlined_call_operand.<no memory space> [shape: f32[1,1], index: 6, kind: input, shape index: {}]
  %s7 = inlined_call_operand.hbm [shape: f32[1,16], index: 7, kind: output, shape index: {}]
  %s8 = sld [smem:[#allocation0]]
  $region38: #{tpu_custom_call.1} parent=0
    _
  %s10 = ssub.s32 1, %s8
  %s11 = scalar_select 0, %s10, %s8
  %12 = sst [smem:[#allocation2]] %s6
  $region1: #{tpu_custom_call.1} parent=0
    #allocation3 [shape = 'u8[512]{0}', space=vmem, size = 0x400, scoped, tag = 'output window, operand 0, single buffered']
    #allocation4 [shape = 's32[1]{0}', space=sflag, size = 0x4, scoped, tag = 'scoped memory for tpu_custom_call.1']
    %13 = vsyncpa [#allocation4], 0
    // Predicated region
    $region2: #{tpu_custom_call.1} parent=1 // pred_check
      _
    $region3: #{tpu_custom_call.1} parent=1 // pred_check_branch
      %15 = sbr.rel (0) target = $region5
    $region4: #{tpu_custom_call.1} parent=1 // pred_region
      _
    $region5: #{tpu_custom_call.1} parent=1 // pred_fallthru
      _
    // Predicated region
    $region6: #{tpu_custom_call.1} parent=1 // pred_check
      _
    $region7: #{tpu_custom_call.1} parent=1 // pred_check_branch
      %17 = sbr.rel (0) target = $region9
    $region8: #{tpu_custom_call.1} parent=1 // pred_region
      _
    $region9: #{tpu_custom_call.1} parent=1 // pred_fallthru
      _
    // Predicated region
    $region10: #{tpu_custom_call.1} parent=1 // pred_check
      _
    $region11: #{tpu_custom_call.1} parent=1 // pred_check_branch
      %19 = sbr.rel (0) target = $region13
    $region12: #{tpu_custom_call.1} parent=1 // pred_region
      _
    $region13: #{tpu_custom_call.1} parent=1 // pred_fallthru
      _
    // Predicated region
    $region14: #{tpu_custom_call.1} parent=1 // pred_check
      _
    $region15: #{tpu_custom_call.1} parent=1 // pred_check_branch
      %21 = sbr.rel (0) target = $region17
    $region16: #{tpu_custom_call.1} parent=1 // pred_region
      _
    $region17: #{tpu_custom_call.1} parent=1 // pred_fallthru
      _
    // Predicated region
    $region18: #{tpu_custom_call.1} parent=1 // pred_check
      _
    $region19: #{tpu_custom_call.1} parent=1 // pred_check_branch
      %23 = sbr.rel (0) target = $region21
    $region20: #{tpu_custom_call.1} parent=1 // pred_region
      _
    $region21: #{tpu_custom_call.1} parent=1 // pred_fallthru
      _
    // Predicated region
    $region22: #{tpu_custom_call.1} parent=1 // pred_check
      _
    $region23: #{tpu_custom_call.1} parent=1 // pred_check_branch
      %25 = sbr.rel (0) target = $region25
    $region24: #{tpu_custom_call.1} parent=1 // pred_region
      _
    $region25: #{tpu_custom_call.1} parent=1 // pred_fallthru
      _
    // Predicated region
    $region26: #{tpu_custom_call.1} parent=1 // pred_check
      _
    $region27: #{tpu_custom_call.1} parent=1 // pred_check_branch
      %27 = sbr.rel (0) target = $region29
    $region28: #{tpu_custom_call.1} parent=1 // pred_region
      _
    $region29: #{tpu_custom_call.1} parent=1 // pred_fallthru
      _
    %v28 = vld [vmem:[%s1] sm:$0xff]
    %v29 = vld [vmem:[%s1 + $0x8] sm:$0xff]
    %v30 = vld [vmem:[%s1 + $0x10] sm:$0xff]
    %v31 = vld [vmem:[%s1 + $0x18] sm:$0xff]
    %v32 = vld [vmem:[%s0] sm:$0xff]
    %v33 = vld [vmem:[%s0 + $0x8] sm:$0xff]
    %v34 = vld [vmem:[%s2] sm:$0xff]
    %v35 = vld [vmem:[%s2 + $0x8] sm:$0xff]
    %v36 = vld [vmem:[%s2 + $0x10] sm:$0xff]
    %v37 = vld [vmem:[%s2 + $0x18] sm:$0xff]
    %39 = vset.pattern.permute.xlu0 0
    %40 = vperm.xlu0 %39, %v34
    %v41 = vpop.permute.xlu0 %40
    %44 = vset.pattern.permute.xlu0 0
    %45 = vperm.xlu0 %44, %v35
    %v46 = vpop.permute.xlu0 %45
    %49 = vset.pattern.permute.xlu0 0
    %50 = vperm.xlu0 %49, %v36
    %v51 = vpop.permute.xlu0 %50
    %54 = vset.pattern.permute.xlu0 0
    %55 = vperm.xlu0 %54, %v37
    %v56 = vpop.permute.xlu0 %55
    %vm58 = vcmask 130048
    %v60 = vsel %vm58, %v28, 0
    %v63 = vsel %vm58, %v29, 0
    %v66 = vsel %vm58, %v30, 0
    %v69 = vsel %vm58, %v31, 0
    %71 = vmatprep.subr.mxu0 0.0
    %v72 = vand.u32 %v32, 4294901760
    %73 = vmatpush1.msra.mxu0 %v72
    %74 = vmatprep.subr.mxu0 0.0
    %v75 = vand.u32 %v33, 4294901760
    %76 = vmatpush1.msra.mxu0 %v75
    %77 = vmatprep.subr.mxu0 0.0
    %78 = vmatpush1.msra.mxu0 0.0
    %79 = vmatprep.subr.mxu0 0.0
    %80 = vmatpush1.msra.mxu0 0.0
    %81 = vmatprep.subr.mxu0 0.0
    %82 = vmatpush1.msra.mxu0 0.0
    %83 = vmatprep.subr.mxu0 0.0
    %84 = vmatpush1.msra.mxu0 0.0
    %85 = vmatprep.subr.mxu0 0.0
    %86 = vmatpush1.msra.mxu0 0.0
    %87 = vmatprep.subr.mxu0 0.0
    %88 = vmatpush1.msra.mxu0 0.0
    %89 = vmatprep.subr.mxu0 0.0
    %90 = vmatpush1.msra.mxu0 0.0
    %91 = vmatprep.subr.mxu0 0.0
    %92 = vmatpush1.msra.mxu0 0.0
    %93 = vmatprep.subr.mxu0 0.0
    %94 = vmatpush1.msra.mxu0 0.0
    %95 = vmatprep.subr.mxu0 0.0
    %96 = vmatpush1.msra.mxu0 0.0
    %97 = vmatprep.subr.mxu0 0.0
    %98 = vmatpush1.msra.mxu0 0.0
    %99 = vmatprep.subr.mxu0 0.0
    %100 = vmatpush1.msra.mxu0 0.0
    %101 = vmatprep.subr.mxu0 0.0
    %102 = vmatpush1.msra.mxu0 0.0
    %103 = vmatprep.subr.mxu0 0.0
    %104 = vmatpush1.msra.mxu0 0.0
    %105 = vmatprep.subr.mxu0 0.0
    %106 = vmatpush1.msra.mxu0 0.0
    %107 = vmatprep.subr.mxu0 0.0
    %108 = vmatpush1.msra.mxu0 0.0
    %109 = vmatprep.subr.mxu0 0.0
    %110 = vmatpush1.msra.mxu0 0.0
    %111 = vmatprep.subr.mxu0 0.0
    %112 = vmatpush1.msra.mxu0 0.0
    %113 = vmatprep.subr.mxu0 0.0
    %114 = vmatpush1.msra.mxu0 0.0
    %115 = vmatprep.subr.mxu0 0.0
    %116 = vmatpush1.msra.mxu0 0.0
    %117 = vmatprep.subr.mxu0 0.0
    %118 = vmatpush1.msra.mxu0 0.0
    %119 = vmatprep.subr.mxu0 0.0
    %120 = vmatpush1.msra.mxu0 0.0
    %121 = vmatprep.subr.mxu0 0.0
    %122 = vmatpush1.msra.mxu0 0.0
    %123 = vmatprep.subr.mxu0 0.0
    %124 = vmatpush1.msra.mxu0 0.0
    %125 = vmatprep.subr.mxu0 0.0
    %126 = vmatpush1.msra.mxu0 0.0
    %127 = vmatprep.subr.mxu0 0.0
    %128 = vmatpush1.msra.mxu0 0.0
    %129 = vmatprep.subr.mxu0 0.0
    %130 = vmatpush1.msra.mxu0 0.0
    %131 = vmatprep.subr.mxu0 0.0
    %132 = vmatpush1.msra.mxu0 0.0
    %133 = vmatprep.subr.mxu0 0.0
    %134 = vmatpush1.msra.mxu0 0.0
    %135 = vmatprep.subr.mxu0 0.0
    %136 = vmatpush1.msra.mxu0 0.0
    %137 = vmatprep.mubr.f32.mxu0 0.0
    %v138 = vand.u32 %v60, 4294901760
    %v139 = vsub.f32 %v60, %v138
    %v140 = vand.u32 %v139, 4294901760
    %v141 = vsub.f32 %v139, %v140
    %v142 = vand.u32 %v141, 4294901760
    %143 = vmatmul.mubr.f32.gmra.mrb[0].mxu0 %v142
    %v144 = vpop.f32.mrb[0].mxu0
    %v145 = vadd.f32 %v41, %v144
    %v146 = vpop.f32.mrb[0].mxu0
    %147 = vmatprep.mubr.f32.mxu0 0.0
    %v148 = vand.u32 %v63, 4294901760
    %v149 = vsub.f32 %v63, %v148
    %v150 = vand.u32 %v149, 4294901760
    %v151 = vsub.f32 %v149, %v150
    %v152 = vand.u32 %v151, 4294901760
    %153 = vmatmul.mubr.f32.gmra.mrb[0].mxu0 %v152
    %v154 = vpop.f32.mrb[0].mxu0
    %v155 = vadd.f32 %v46, %v154
    %v156 = vpop.f32.mrb[0].mxu0
    %157 = vmatprep.mubr.f32.mxu0 0.0
    %v158 = vand.u32 %v66, 4294901760
    %v159 = vsub.f32 %v66, %v158
    %v160 = vand.u32 %v159, 4294901760
    %v161 = vsub.f32 %v159, %v160
    %v162 = vand.u32 %v161, 4294901760
    %163 = vmatmul.mubr.f32.gmra.mrb[0].mxu0 %v162
    %v164 = vpop.f32.mrb[0].mxu0
    %v165 = vadd.f32 %v51, %v164
    %v166 = vpop.f32.mrb[0].mxu0
    %167 = vmatprep.mubr.f32.mxu0 0.0
    %v168 = vand.u32 %v69, 4294901760
    %v169 = vsub.f32 %v69, %v168
    %v170 = vand.u32 %v169, 4294901760
    %v171 = vsub.f32 %v169, %v170
    %v172 = vand.u32 %v171, 4294901760
    %173 = vmatmul.mubr.f32.gmra.mrb[0].mxu0 %v172
    %v174 = vpop.f32.mrb[0].mxu0
    %v175 = vadd.f32 %v56, %v174
    %v176 = vpop.f32.mrb[0].mxu0
    %177 = vdwg.mxu0
    %178 = vmatprep.subr.mxu0 0.0
    %v179 = vand.u32 %v32, 4294901760
    %v180 = vsub.f32 %v32, %v179
    %v181 = vand.u32 %v180, 4294901760
    %v182 = vsub.f32 %v180, %v181
    %v183 = vand.u32 %v182, 4294901760
    %184 = vmatpush1.msra.mxu0 %v183
    %185 = vmatprep.subr.mxu0 0.0
    %v186 = vand.u32 %v33, 4294901760
    %v187 = vsub.f32 %v33, %v186
    %v188 = vand.u32 %v187, 4294901760
    %v189 = vsub.f32 %v187, %v188
    %v190 = vand.u32 %v189, 4294901760
    %191 = vmatpush1.msra.mxu0 %v190
    %192 = vmatprep.subr.mxu0 0.0
    %193 = vmatpush1.msra.mxu0 0.0
    %194 = vmatprep.subr.mxu0 0.0
    %195 = vmatpush1.msra.mxu0 0.0
    %196 = vmatprep.subr.mxu0 0.0
    %197 = vmatpush1.msra.mxu0 0.0
    %198 = vmatprep.subr.mxu0 0.0
    %199 = vmatpush1.msra.mxu0 0.0
    %200 = vmatprep.subr.mxu0 0.0
    %201 = vmatpush1.msra.mxu0 0.0
    %202 = vmatprep.subr.mxu0 0.0
    %203 = vmatpush1.msra.mxu0 0.0
    %204 = vmatprep.subr.mxu0 0.0
    %205 = vmatpush1.msra.mxu0 0.0
    %206 = vmatprep.subr.mxu0 0.0
    %207 = vmatpush1.msra.mxu0 0.0
    %208 = vmatprep.subr.mxu0 0.0
    %209 = vmatpush1.msra.mxu0 0.0
    %210 = vmatprep.subr.mxu0 0.0
    %211 = vmatpush1.msra.mxu0 0.0
    %212 = vmatprep.subr.mxu0 0.0
    %213 = vmatpush1.msra.mxu0 0.0
    %214 = vmatprep.subr.mxu0 0.0
    %215 = vmatpush1.msra.mxu0 0.0
    %216 = vmatprep.subr.mxu0 0.0
    %217 = vmatpush1.msra.mxu0 0.0
    %218 = vmatprep.subr.mxu0 0.0
    %219 = vmatpush1.msra.mxu0 0.0
    %220 = vmatprep.subr.mxu0 0.0
    %221 = vmatpush1.msra.mxu0 0.0
    %222 = vmatprep.subr.mxu0 0.0
    %223 = vmatpush1.msra.mxu0 0.0
    %224 = vmatprep.subr.mxu0 0.0
    %225 = vmatpush1.msra.mxu0 0.0
    %226 = vmatprep.subr.mxu0 0.0
    %227 = vmatpush1.msra.mxu0 0.0
    %228 = vmatprep.subr.mxu0 0.0
    %229 = vmatpush1.msra.mxu0 0.0
    %230 = vmatprep.subr.mxu0 0.0
    %231 = vmatpush1.msra.mxu0 0.0
    %232 = vmatprep.subr.mxu0 0.0
    %233 = vmatpush1.msra.mxu0 0.0
    %234 = vmatprep.subr.mxu0 0.0
    %235 = vmatpush1.msra.mxu0 0.0
    %236 = vmatprep.subr.mxu0 0.0
    %237 = vmatpush1.msra.mxu0 0.0
    %238 = vmatprep.subr.mxu0 0.0
    %239 = vmatpush1.msra.mxu0 0.0
    %240 = vmatprep.subr.mxu0 0.0
    %241 = vmatpush1.msra.mxu0 0.0
    %242 = vmatprep.subr.mxu0 0.0
    %243 = vmatpush1.msra.mxu0 0.0
    %244 = vmatprep.subr.mxu0 0.0
    %245 = vmatpush1.msra.mxu0 0.0
    %246 = vmatprep.subr.mxu0 0.0
    %247 = vmatpush1.msra.mxu0 0.0
    %248 = vmatprep.subr.mxu0 0.0
    %249 = vmatpush1.msra.mxu0 0.0
    %250 = vmatprep.subr.mxu0 0.0
    %251 = vmatpush1.msra.mxu0 0.0
    %252 = vmatprep.mubr.f32.mxu0 0.0
    %v253 = vand.u32 %v60, 4294901760
    %254 = vmatmul.mubr.f32.gmra.mrb[0].mxu0 %v253
    %v255 = vpop.f32.mrb[0].mxu0
    %v256 = vadd.f32 %v145, %v255
    %v257 = vpop.f32.mrb[0].mxu0
    %258 = vmatprep.mubr.f32.mxu0 0.0
    %v259 = vand.u32 %v63, 4294901760
    %260 = vmatmul.mubr.f32.gmra.mrb[0].mxu0 %v259
    %v261 = vpop.f32.mrb[0].mxu0
    %v262 = vadd.f32 %v155, %v261
    %v263 = vpop.f32.mrb[0].mxu0
    %264 = vmatprep.mubr.f32.mxu0 0.0
    %v265 = vand.u32 %v66, 4294901760
    %266 = vmatmul.mubr.f32.gmra.mrb[0].mxu0 %v265
    %v267 = vpop.f32.mrb[0].mxu0
    %v268 = vadd.f32 %v165, %v267
    %v269 = vpop.f32.mrb[0].mxu0
    %270 = vmatprep.mubr.f32.mxu0 0.0
    %v271 = vand.u32 %v69, 4294901760
    %272 = vmatmul.mubr.f32.gmra.mrb[0].mxu0 %v271
    %v273 = vpop.f32.mrb[0].mxu0
    %v274 = vadd.f32 %v175, %v273
    %v275 = vpop.f32.mrb[0].mxu0
    %276 = vdwg.mxu0
    %277 = vmatprep.subr.mxu0 0.0
    %v278 = vand.u32 %v32, 4294901760
    %v279 = vsub.f32 %v32, %v278
    %280 = vmatpush1.msra.mxu0 %v279
    %281 = vmatprep.subr.mxu0 0.0
    %v282 = vand.u32 %v33, 4294901760
    %v283 = vsub.f32 %v33, %v282
    %284 = vmatpush1.msra.mxu0 %v283
    %285 = vmatprep.subr.mxu0 0.0
    %286 = vmatpush1.msra.mxu0 0.0
    %287 = vmatprep.subr.mxu0 0.0
    %288 = vmatpush1.msra.mxu0 0.0
    %289 = vmatprep.subr.mxu0 0.0
    %290 = vmatpush1.msra.mxu0 0.0
    %291 = vmatprep.subr.mxu0 0.0
    %292 = vmatpush1.msra.mxu0 0.0
    %293 = vmatprep.subr.mxu0 0.0
    %294 = vmatpush1.msra.mxu0 0.0
    %295 = vmatprep.subr.mxu0 0.0
    %296 = vmatpush1.msra.mxu0 0.0
    %297 = vmatprep.subr.mxu0 0.0
    %298 = vmatpush1.msra.mxu0 0.0
    %299 = vmatprep.subr.mxu0 0.0
    %300 = vmatpush1.msra.mxu0 0.0
    %301 = vmatprep.subr.mxu0 0.0
    %302 = vmatpush1.msra.mxu0 0.0
    %303 = vmatprep.subr.mxu0 0.0
    %304 = vmatpush1.msra.mxu0 0.0
    %305 = vmatprep.subr.mxu0 0.0
    %306 = vmatpush1.msra.mxu0 0.0
    %307 = vmatprep.subr.mxu0 0.0
    %308 = vmatpush1.msra.mxu0 0.0
    %309 = vmatprep.subr.mxu0 0.0
    %310 = vmatpush1.msra.mxu0 0.0
    %311 = vmatprep.subr.mxu0 0.0
    %312 = vmatpush1.msra.mxu0 0.0
    %313 = vmatprep.subr.mxu0 0.0
    %314 = vmatpush1.msra.mxu0 0.0
    %315 = vmatprep.subr.mxu0 0.0
    %316 = vmatpush1.msra.mxu0 0.0
    %317 = vmatprep.subr.mxu0 0.0
    %318 = vmatpush1.msra.mxu0 0.0
    %319 = vmatprep.subr.mxu0 0.0
    %320 = vmatpush1.msra.mxu0 0.0
    %321 = vmatprep.subr.mxu0 0.0
    %322 = vmatpush1.msra.mxu0 0.0
    %323 = vmatprep.subr.mxu0 0.0
    %324 = vmatpush1.msra.mxu0 0.0
    %325 = vmatprep.subr.mxu0 0.0
    %326 = vmatpush1.msra.mxu0 0.0
    %327 = vmatprep.subr.mxu0 0.0
    %328 = vmatpush1.msra.mxu0 0.0
    %329 = vmatprep.subr.mxu0 0.0
    %330 = vmatpush1.msra.mxu0 0.0
    %331 = vmatprep.subr.mxu0 0.0
    %332 = vmatpush1.msra.mxu0 0.0
    %333 = vmatprep.subr.mxu0 0.0
    %334 = vmatpush1.msra.mxu0 0.0
    %335 = vmatprep.subr.mxu0 0.0
    %336 = vmatpush1.msra.mxu0 0.0
    %337 = vmatprep.subr.mxu0 0.0
    %338 = vmatpush1.msra.mxu0 0.0
    %339 = vmatprep.subr.mxu0 0.0
    %340 = vmatpush1.msra.mxu0 0.0
    %341 = vmatprep.subr.mxu0 0.0
    %342 = vmatpush1.msra.mxu0 0.0
    %343 = vmatprep.subr.mxu0 0.0
    %344 = vmatpush1.msra.mxu0 0.0
    %345 = vmatprep.mubr.f32.mxu0 0.0
    %v346 = vand.u32 %v60, 4294901760
    %v347 = vsub.f32 %v60, %v346
    %348 = vmatmul.mubr.f32.gmra.mrb[0].mxu0 %v347
    %v349 = vpop.f32.mrb[0].mxu0
    %v350 = vadd.f32 %v256, %v349
    %v351 = vpop.f32.mrb[0].mxu0
    %352 = vmatprep.mubr.f32.mxu0 0.0
    %v353 = vand.u32 %v63, 4294901760
    %v354 = vsub.f32 %v63, %v353
    %355 = vmatmul.mubr.f32.gmra.mrb[0].mxu0 %v354
    %v356 = vpop.f32.mrb[0].mxu0
    %v357 = vadd.f32 %v262, %v356
    %v358 = vpop.f32.mrb[0].mxu0
    %359 = vmatprep.mubr.f32.mxu0 0.0
    %v360 = vand.u32 %v66, 4294901760
    %v361 = vsub.f32 %v66, %v360
    %362 = vmatmul.mubr.f32.gmra.mrb[0].mxu0 %v361
    %v363 = vpop.f32.mrb[0].mxu0
    %v364 = vadd.f32 %v268, %v363
    %v365 = vpop.f32.mrb[0].mxu0
    %366 = vmatprep.mubr.f32.mxu0 0.0
    %v367 = vand.u32 %v69, 4294901760
    %v368 = vsub.f32 %v69, %v367
    %369 = vmatmul.mubr.f32.gmra.mrb[0].mxu0 %v368
    %v370 = vpop.f32.mrb[0].mxu0
    %v371 = vadd.f32 %v274, %v370
    %v372 = vpop.f32.mrb[0].mxu0
    %373 = vdwg.mxu0
    %374 = vmatprep.subr.mxu0 0.0
    %v375 = vand.u32 %v32, 4294901760
    %376 = vmatpush1.msra.mxu0 %v375
    %377 = vmatprep.subr.mxu0 0.0
    %v378 = vand.u32 %v33, 4294901760
    %379 = vmatpush1.msra.mxu0 %v378
    %380 = vmatprep.subr.mxu0 0.0
    %381 = vmatpush1.msra.mxu0 0.0
    %382 = vmatprep.subr.mxu0 0.0
    %383 = vmatpush1.msra.mxu0 0.0
    %384 = vmatprep.subr.mxu0 0.0
    %385 = vmatpush1.msra.mxu0 0.0
    %386 = vmatprep.subr.mxu0 0.0
    %387 = vmatpush1.msra.mxu0 0.0
    %388 = vmatprep.subr.mxu0 0.0
    %389 = vmatpush1.msra.mxu0 0.0
    %390 = vmatprep.subr.mxu0 0.0
    %391 = vmatpush1.msra.mxu0 0.0
    %392 = vmatprep.subr.mxu0 0.0
    %393 = vmatpush1.msra.mxu0 0.0
    %394 = vmatprep.subr.mxu0 0.0
    %395 = vmatpush1.msra.mxu0 0.0
    %396 = vmatprep.subr.mxu0 0.0
    %397 = vmatpush1.msra.mxu0 0.0
    %398 = vmatprep.subr.mxu0 0.0
    %399 = vmatpush1.msra.mxu0 0.0
    %400 = vmatprep.subr.mxu0 0.0
    %401 = vmatpush1.msra.mxu0 0.0
    %402 = vmatprep.subr.mxu0 0.0
    %403 = vmatpush1.msra.mxu0 0.0
    %404 = vmatprep.subr.mxu0 0.0
    %405 = vmatpush1.msra.mxu0 0.0
    %406 = vmatprep.subr.mxu0 0.0
    %407 = vmatpush1.msra.mxu0 0.0
    %408 = vmatprep.subr.mxu0 0.0
    %409 = vmatpush1.msra.mxu0 0.0
    %410 = vmatprep.subr.mxu0 0.0
    %411 = vmatpush1.msra.mxu0 0.0
    %412 = vmatprep.subr.mxu0 0.0
    %413 = vmatpush1.msra.mxu0 0.0
    %414 = vmatprep.subr.mxu0 0.0
    %415 = vmatpush1.msra.mxu0 0.0
    %416 = vmatprep.subr.mxu0 0.0
    %417 = vmatpush1.msra.mxu0 0.0
    %418 = vmatprep.subr.mxu0 0.0
    %419 = vmatpush1.msra.mxu0 0.0
    %420 = vmatprep.subr.mxu0 0.0
    %421 = vmatpush1.msra.mxu0 0.0
    %422 = vmatprep.subr.mxu0 0.0
    %423 = vmatpush1.msra.mxu0 0.0
    %424 = vmatprep.subr.mxu0 0.0
    %425 = vmatpush1.msra.mxu0 0.0
    %426 = vmatprep.subr.mxu0 0.0
    %427 = vmatpush1.msra.mxu0 0.0
    %428 = vmatprep.subr.mxu0 0.0
    %429 = vmatpush1.msra.mxu0 0.0
    %430 = vmatprep.subr.mxu0 0.0
    %431 = vmatpush1.msra.mxu0 0.0
    %432 = vmatprep.subr.mxu0 0.0
    %433 = vmatpush1.msra.mxu0 0.0
    %434 = vmatprep.subr.mxu0 0.0
    %435 = vmatpush1.msra.mxu0 0.0
    %436 = vmatprep.subr.mxu0 0.0
    %437 = vmatpush1.msra.mxu0 0.0
    %438 = vmatprep.subr.mxu0 0.0
    %439 = vmatpush1.msra.mxu0 0.0
    %440 = vmatprep.mubr.f32.mxu0 0.0
    %v441 = vand.u32 %v60, 4294901760
    %v442 = vsub.f32 %v60, %v441
    %v443 = vand.u32 %v442, 4294901760
    %444 = vmatmul.mubr.f32.gmra.mrb[0].mxu0 %v443
    %v445 = vpop.f32.mrb[0].mxu0
    %v446 = vadd.f32 %v350, %v445
    %v447 = vpop.f32.mrb[0].mxu0
    %448 = vmatprep.mubr.f32.mxu0 0.0
    %v449 = vand.u32 %v63, 4294901760
    %v450 = vsub.f32 %v63, %v449
    %v451 = vand.u32 %v450, 4294901760
    %452 = vmatmul.mubr.f32.gmra.mrb[0].mxu0 %v451
    %v453 = vpop.f32.mrb[0].mxu0
    %v454 = vadd.f32 %v357, %v453
    %v455 = vpop.f32.mrb[0].mxu0
    %456 = vmatprep.mubr.f32.mxu0 0.0
    %v457 = vand.u32 %v66, 4294901760
    %v458 = vsub.f32 %v66, %v457
    %v459 = vand.u32 %v458, 4294901760
    %460 = vmatmul.mubr.f32.gmra.mrb[0].mxu0 %v459
    %v461 = vpop.f32.mrb[0].mxu0
    %v462 = vadd.f32 %v364, %v461
    %v463 = vpop.f32.mrb[0].mxu0
    %464 = vmatprep.mubr.f32.mxu0 0.0
    %v465 = vand.u32 %v69, 4294901760
    %v466 = vsub.f32 %v69, %v465
    %v467 = vand.u32 %v466, 4294901760
    %468 = vmatmul.mubr.f32.gmra.mrb[0].mxu0 %v467
    %v469 = vpop.f32.mrb[0].mxu0
    %v470 = vadd.f32 %v371, %v469
    %v471 = vpop.f32.mrb[0].mxu0
    %472 = vdwg.mxu0
    %473 = vmatprep.subr.mxu0 0.0
    %v474 = vand.u32 %v32, 4294901760
    %v475 = vsub.f32 %v32, %v474
    %v476 = vand.u32 %v475, 4294901760
    %477 = vmatpush1.msra.mxu0 %v476
    %478 = vmatprep.subr.mxu0 0.0
    %v479 = vand.u32 %v33, 4294901760
    %v480 = vsub.f32 %v33, %v479
    %v481 = vand.u32 %v480, 4294901760
    %482 = vmatpush1.msra.mxu0 %v481
    %483 = vmatprep.subr.mxu0 0.0
    %484 = vmatpush1.msra.mxu0 0.0
    %485 = vmatprep.subr.mxu0 0.0
    %486 = vmatpush1.msra.mxu0 0.0
    %487 = vmatprep.subr.mxu0 0.0
    %488 = vmatpush1.msra.mxu0 0.0
    %489 = vmatprep.subr.mxu0 0.0
    %490 = vmatpush1.msra.mxu0 0.0
    %491 = vmatprep.subr.mxu0 0.0
    %492 = vmatpush1.msra.mxu0 0.0
    %493 = vmatprep.subr.mxu0 0.0
    %494 = vmatpush1.msra.mxu0 0.0
    %495 = vmatprep.subr.mxu0 0.0
    %496 = vmatpush1.msra.mxu0 0.0
    %497 = vmatprep.subr.mxu0 0.0
    %498 = vmatpush1.msra.mxu0 0.0
    %499 = vmatprep.subr.mxu0 0.0
    %500 = vmatpush1.msra.mxu0 0.0
    %501 = vmatprep.subr.mxu0 0.0
    %502 = vmatpush1.msra.mxu0 0.0
    %503 = vmatprep.subr.mxu0 0.0
    %504 = vmatpush1.msra.mxu0 0.0
    %505 = vmatprep.subr.mxu0 0.0
    %506 = vmatpush1.msra.mxu0 0.0
    %507 = vmatprep.subr.mxu0 0.0
    %508 = vmatpush1.msra.mxu0 0.0
    %509 = vmatprep.subr.mxu0 0.0
    %510 = vmatpush1.msra.mxu0 0.0
    %511 = vmatprep.subr.mxu0 0.0
    %512 = vmatpush1.msra.mxu0 0.0
    %513 = vmatprep.subr.mxu0 0.0
    %514 = vmatpush1.msra.mxu0 0.0
    %515 = vmatprep.subr.mxu0 0.0
    %516 = vmatpush1.msra.mxu0 0.0
    %517 = vmatprep.subr.mxu0 0.0
    %518 = vmatpush1.msra.mxu0 0.0
    %519 = vmatprep.subr.mxu0 0.0
    %520 = vmatpush1.msra.mxu0 0.0
    %521 = vmatprep.subr.mxu0 0.0
    %522 = vmatpush1.msra.mxu0 0.0
    %523 = vmatprep.subr.mxu0 0.0
    %524 = vmatpush1.msra.mxu0 0.0
    %525 = vmatprep.subr.mxu0 0.0
    %526 = vmatpush1.msra.mxu0 0.0
    %527 = vmatprep.subr.mxu0 0.0
    %528 = vmatpush1.msra.mxu0 0.0
    %529 = vmatprep.subr.mxu0 0.0
    %530 = vmatpush1.msra.mxu0 0.0
    %531 = vmatprep.subr.mxu0 0.0
    %532 = vmatpush1.msra.mxu0 0.0
    %533 = vmatprep.subr.mxu0 0.0
    %534 = vmatpush1.msra.mxu0 0.0
    %535 = vmatprep.subr.mxu0 0.0
    %536 = vmatpush1.msra.mxu0 0.0
    %537 = vmatprep.subr.mxu0 0.0
    %538 = vmatpush1.msra.mxu0 0.0
    %539 = vmatprep.subr.mxu0 0.0
    %540 = vmatpush1.msra.mxu0 0.0
    %541 = vmatprep.subr.mxu0 0.0
    %542 = vmatpush1.msra.mxu0 0.0
    %543 = vmatprep.mubr.f32.mxu0 0.0
    %v544 = vand.u32 %v60, 4294901760
    %545 = vmatmul.mubr.f32.gmra.mrb[0].mxu0 %v544
    %v546 = vpop.f32.mrb[0].mxu0
    %v547 = vadd.f32 %v446, %v546
    %v548 = vpop.f32.mrb[0].mxu0
    %549 = vmatprep.mubr.f32.mxu0 0.0
    %v550 = vand.u32 %v63, 4294901760
    %551 = vmatmul.mubr.f32.gmra.mrb[0].mxu0 %v550
    %v552 = vpop.f32.mrb[0].mxu0
    %v553 = vadd.f32 %v454, %v552
    %v554 = vpop.f32.mrb[0].mxu0
    %555 = vmatprep.mubr.f32.mxu0 0.0
    %v556 = vand.u32 %v66, 4294901760
    %557 = vmatmul.mubr.f32.gmra.mrb[0].mxu0 %v556
    %v558 = vpop.f32.mrb[0].mxu0
    %v559 = vadd.f32 %v462, %v558
    %v560 = vpop.f32.mrb[0].mxu0
    %561 = vmatprep.mubr.f32.mxu0 0.0
    %v562 = vand.u32 %v69, 4294901760
    %563 = vmatmul.mubr.f32.gmra.mrb[0].mxu0 %v562
    %v564 = vpop.f32.mrb[0].mxu0
    %v565 = vadd.f32 %v470, %v564
    %v566 = vpop.f32.mrb[0].mxu0
    %567 = vdwg.mxu0
    %568 = vmatprep.subr.mxu0 0.0
    %v569 = vand.u32 %v32, 4294901760
    %570 = vmatpush1.msra.mxu0 %v569
    %571 = vmatprep.subr.mxu0 0.0
    %v572 = vand.u32 %v33, 4294901760
    %573 = vmatpush1.msra.mxu0 %v572
    %574 = vmatprep.subr.mxu0 0.0
    %575 = vmatpush1.msra.mxu0 0.0
    %576 = vmatprep.subr.mxu0 0.0
    %577 = vmatpush1.msra.mxu0 0.0
    %578 = vmatprep.subr.mxu0 0.0
    %579 = vmatpush1.msra.mxu0 0.0
    %580 = vmatprep.subr.mxu0 0.0
    %581 = vmatpush1.msra.mxu0 0.0
    %582 = vmatprep.subr.mxu0 0.0
    %583 = vmatpush1.msra.mxu0 0.0
    %584 = vmatprep.subr.mxu0 0.0
    %585 = vmatpush1.msra.mxu0 0.0
    %586 = vmatprep.subr.mxu0 0.0
    %587 = vmatpush1.msra.mxu0 0.0
    %588 = vmatprep.subr.mxu0 0.0
    %589 = vmatpush1.msra.mxu0 0.0
    %590 = vmatprep.subr.mxu0 0.0
    %591 = vmatpush1.msra.mxu0 0.0
    %592 = vmatprep.subr.mxu0 0.0
    %593 = vmatpush1.msra.mxu0 0.0
    %594 = vmatprep.subr.mxu0 0.0
    %595 = vmatpush1.msra.mxu0 0.0
    %596 = vmatprep.subr.mxu0 0.0
    %597 = vmatpush1.msra.mxu0 0.0
    %598 = vmatprep.subr.mxu0 0.0
    %599 = vmatpush1.msra.mxu0 0.0
    %600 = vmatprep.subr.mxu0 0.0
    %601 = vmatpush1.msra.mxu0 0.0
    %602 = vmatprep.subr.mxu0 0.0
    %603 = vmatpush1.msra.mxu0 0.0
    %604 = vmatprep.subr.mxu0 0.0
    %605 = vmatpush1.msra.mxu0 0.0
    %606 = vmatprep.subr.mxu0 0.0
    %607 = vmatpush1.msra.mxu0 0.0
    %608 = vmatprep.subr.mxu0 0.0
    %609 = vmatpush1.msra.mxu0 0.0
    %610 = vmatprep.subr.mxu0 0.0
    %611 = vmatpush1.msra.mxu0 0.0
    %612 = vmatprep.subr.mxu0 0.0
    %613 = vmatpush1.msra.mxu0 0.0
    %614 = vmatprep.subr.mxu0 0.0
    %615 = vmatpush1.msra.mxu0 0.0
    %616 = vmatprep.subr.mxu0 0.0
    %617 = vmatpush1.msra.mxu0 0.0
    %618 = vmatprep.subr.mxu0 0.0
    %619 = vmatpush1.msra.mxu0 0.0
    %620 = vmatprep.subr.mxu0 0.0
    %621 = vmatpush1.msra.mxu0 0.0
    %622 = vmatprep.subr.mxu0 0.0
    %623 = vmatpush1.msra.mxu0 0.0
    %624 = vmatprep.subr.mxu0 0.0
    %625 = vmatpush1.msra.mxu0 0.0
    %626 = vmatprep.subr.mxu0 0.0
    %627 = vmatpush1.msra.mxu0 0.0
    %628 = vmatprep.subr.mxu0 0.0
    %629 = vmatpush1.msra.mxu0 0.0
    %630 = vmatprep.subr.mxu0 0.0
    %631 = vmatpush1.msra.mxu0 0.0
    %632 = vmatprep.subr.mxu0 0.0
    %633 = vmatpush1.msra.mxu0 0.0
    %634 = vmatprep.mubr.f32.mxu0 0.0
    %v635 = vand.u32 %v60, 4294901760
    %636 = vmatmul.mubr.f32.gmra.mrb[0].mxu0 %v635
    %v637 = vpop.f32.mrb[0].mxu0
    %v638 = vadd.f32 %v547, %v637
    %v639 = vpop.f32.mrb[0].mxu0
    %640 = vmatprep.mubr.f32.mxu0 0.0
    %v641 = vand.u32 %v63, 4294901760
    %642 = vmatmul.mubr.f32.gmra.mrb[0].mxu0 %v641
    %v643 = vpop.f32.mrb[0].mxu0
    %v644 = vadd.f32 %v553, %v643
    %v645 = vpop.f32.mrb[0].mxu0
    %646 = vmatprep.mubr.f32.mxu0 0.0
    %v647 = vand.u32 %v66, 4294901760
    %648 = vmatmul.mubr.f32.gmra.mrb[0].mxu0 %v647
    %v649 = vpop.f32.mrb[0].mxu0
    %v650 = vadd.f32 %v559, %v649
    %v651 = vpop.f32.mrb[0].mxu0
    %652 = vmatprep.mubr.f32.mxu0 0.0
    %v653 = vand.u32 %v69, 4294901760
    %654 = vmatmul.mubr.f32.gmra.mrb[0].mxu0 %v653
    %v655 = vpop.f32.mrb[0].mxu0
    %v656 = vadd.f32 %v565, %v655
    %v657 = vpop.f32.mrb[0].mxu0
    %658 = vdwg.mxu0
    %v659 = vtanh.pop %v638
    %v660 = vtanh.pop %v644
    %v661 = vtanh.pop %v650
    %v662 = vtanh.pop %v656
    %v663 = vld [vmem:[%s3] sm:$0xff]
    %v664 = vld [vmem:[%s3 + $0x8] sm:$0xff]
    %v665 = vld [vmem:[%s3 + $0x10] sm:$0xff]
    %v666 = vld [vmem:[%s3 + $0x18] sm:$0xff]
    %v667 = vld [vmem:[%s4] sm:$0xff]
    %v668 = vld [vmem:[%s4 + $0x8] sm:$0xff]
    %v669 = vld [vmem:[%s4 + $0x10] sm:$0xff]
    %v670 = vld [vmem:[%s4 + $0x18] sm:$0xff]
    %672 = vset.pattern.permute.xlu0 0
    %673 = vperm.xlu0 %672, %v667
    %v674 = vpop.permute.xlu0 %673
    %677 = vset.pattern.permute.xlu0 0
    %678 = vperm.xlu0 %677, %v668
    %v679 = vpop.permute.xlu0 %678
    %682 = vset.pattern.permute.xlu0 0
    %683 = vperm.xlu0 %682, %v669
    %v684 = vpop.permute.xlu0 %683
    %687 = vset.pattern.permute.xlu0 0
    %688 = vperm.xlu0 %687, %v670
    %v689 = vpop.permute.xlu0 %688
    %vm691 = vcmask 261120
    %v693 = vsel %vm691, %v663, 0
    %v696 = vsel %vm691, %v664, 0
    %v699 = vsel %vm691, %v665, 0
    %v702 = vsel %vm691, %v666, 0
    %704 = vmatprep.subr.mxu0 0.0
    %v705 = vand.u32 %v659, 4294901760
    %706 = vmatpush1.msra.mxu0 %v705
    %707 = vmatprep.subr.mxu0 0.0
    %v708 = vand.u32 %v660, 4294901760
    %709 = vmatpush1.msra.mxu0 %v708
    %710 = vmatprep.subr.mxu0 0.0
    %v711 = vand.u32 %v661, 4294901760
    %712 = vmatpush1.msra.mxu0 %v711
    %713 = vmatprep.subr.mxu0 0.0
    %v714 = vand.u32 %v662, 4294901760
    %715 = vmatpush1.msra.mxu0 %v714
    %716 = vmatprep.subr.mxu0 0.0
    %717 = vmatpush1.msra.mxu0 0.0
    %718 = vmatprep.subr.mxu0 0.0
    %719 = vmatpush1.msra.mxu0 0.0
    %720 = vmatprep.subr.mxu0 0.0
    %721 = vmatpush1.msra.mxu0 0.0
    %722 = vmatprep.subr.mxu0 0.0
    %723 = vmatpush1.msra.mxu0 0.0
    %724 = vmatprep.subr.mxu0 0.0
    %725 = vmatpush1.msra.mxu0 0.0
    %726 = vmatprep.subr.mxu0 0.0
    %727 = vmatpush1.msra.mxu0 0.0
    %728 = vmatprep.subr.mxu0 0.0
    %729 = vmatpush1.msra.mxu0 0.0
    %730 = vmatprep.subr.mxu0 0.0
    %731 = vmatpush1.msra.mxu0 0.0
    %732 = vmatprep.subr.mxu0 0.0
    %733 = vmatpush1.msra.mxu0 0.0
    %734 = vmatprep.subr.mxu0 0.0
    %735 = vmatpush1.msra.mxu0 0.0
    %736 = vmatprep.subr.mxu0 0.0
    %737 = vmatpush1.msra.mxu0 0.0
    %738 = vmatprep.subr.mxu0 0.0
    %739 = vmatpush1.msra.mxu0 0.0
    %740 = vmatprep.subr.mxu0 0.0
    %741 = vmatpush1.msra.mxu0 0.0
    %742 = vmatprep.subr.mxu0 0.0
    %743 = vmatpush1.msra.mxu0 0.0
    %744 = vmatprep.subr.mxu0 0.0
    %745 = vmatpush1.msra.mxu0 0.0
    %746 = vmatprep.subr.mxu0 0.0
    %747 = vmatpush1.msra.mxu0 0.0
    %748 = vmatprep.subr.mxu0 0.0
    %749 = vmatpush1.msra.mxu0 0.0
    %750 = vmatprep.subr.mxu0 0.0
    %751 = vmatpush1.msra.mxu0 0.0
    %752 = vmatprep.subr.mxu0 0.0
    %753 = vmatpush1.msra.mxu0 0.0
    %754 = vmatprep.subr.mxu0 0.0
    %755 = vmatpush1.msra.mxu0 0.0
    %756 = vmatprep.subr.mxu0 0.0
    %757 = vmatpush1.msra.mxu0 0.0
    %758 = vmatprep.subr.mxu0 0.0
    %759 = vmatpush1.msra.mxu0 0.0
    %760 = vmatprep.subr.mxu0 0.0
    %761 = vmatpush1.msra.mxu0 0.0
    %762 = vmatprep.subr.mxu0 0.0
    %763 = vmatpush1.msra.mxu0 0.0
    %764 = vmatprep.subr.mxu0 0.0
    %765 = vmatpush1.msra.mxu0 0.0
    %766 = vmatprep.subr.mxu0 0.0
    %767 = vmatpush1.msra.mxu0 0.0
    %768 = vmatprep.subr.mxu0 0.0
    %769 = vmatpush1.msra.mxu0 0.0
    %770 = vmatprep.subr.mxu0 0.0
    %771 = vmatpush1.msra.mxu0 0.0
    %772 = vmatprep.mubr.f32.mxu0 0.0
    %v773 = vand.u32 %v693, 4294901760
    %v774 = vsub.f32 %v693, %v773
    %v775 = vand.u32 %v774, 4294901760
    %v776 = vsub.f32 %v774, %v775
    %v777 = vand.u32 %v776, 4294901760
    %778 = vmatmul.mubr.f32.gmra.mrb[0].mxu0 %v777
    %v779 = vpop.f32.mrb[0].mxu0
    %v780 = vadd.f32 %v674, %v779
    %v781 = vpop.f32.mrb[0].mxu0
    %782 = vmatprep.mubr.f32.mxu0 0.0
    %v783 = vand.u32 %v696, 4294901760
    %v784 = vsub.f32 %v696, %v783
    %v785 = vand.u32 %v784, 4294901760
    %v786 = vsub.f32 %v784, %v785
    %v787 = vand.u32 %v786, 4294901760
    %788 = vmatmul.mubr.f32.gmra.mrb[0].mxu0 %v787
    %v789 = vpop.f32.mrb[0].mxu0
    %v790 = vadd.f32 %v679, %v789
    %v791 = vpop.f32.mrb[0].mxu0
    %792 = vmatprep.mubr.f32.mxu0 0.0
    %v793 = vand.u32 %v699, 4294901760
    %v794 = vsub.f32 %v699, %v793
    %v795 = vand.u32 %v794, 4294901760
    %v796 = vsub.f32 %v794, %v795
    %v797 = vand.u32 %v796, 4294901760
    %798 = vmatmul.mubr.f32.gmra.mrb[0].mxu0 %v797
    %v799 = vpop.f32.mrb[0].mxu0
    %v800 = vadd.f32 %v684, %v799
    %v801 = vpop.f32.mrb[0].mxu0
    %802 = vmatprep.mubr.f32.mxu0 0.0
    %v803 = vand.u32 %v702, 4294901760
    %v804 = vsub.f32 %v702, %v803
    %v805 = vand.u32 %v804, 4294901760
    %v806 = vsub.f32 %v804, %v805
    %v807 = vand.u32 %v806, 4294901760
    %808 = vmatmul.mubr.f32.gmra.mrb[0].mxu0 %v807
    %v809 = vpop.f32.mrb[0].mxu0
    %v810 = vadd.f32 %v689, %v809
    %v811 = vpop.f32.mrb[0].mxu0
    %812 = vdwg.mxu0
    %813 = vmatprep.subr.mxu0 0.0
    %v814 = vand.u32 %v659, 4294901760
    %v815 = vsub.f32 %v659, %v814
    %v816 = vand.u32 %v815, 4294901760
    %v817 = vsub.f32 %v815, %v816
    %v818 = vand.u32 %v817, 4294901760
    %819 = vmatpush1.msra.mxu0 %v818
    %820 = vmatprep.subr.mxu0 0.0
    %v821 = vand.u32 %v660, 4294901760
    %v822 = vsub.f32 %v660, %v821
    %v823 = vand.u32 %v822, 4294901760
    %v824 = vsub.f32 %v822, %v823
    %v825 = vand.u32 %v824, 4294901760
    %826 = vmatpush1.msra.mxu0 %v825
    %827 = vmatprep.subr.mxu0 0.0
    %v828 = vand.u32 %v661, 4294901760
    %v829 = vsub.f32 %v661, %v828
    %v830 = vand.u32 %v829, 4294901760
    %v831 = vsub.f32 %v829, %v830
    %v832 = vand.u32 %v831, 4294901760
    %833 = vmatpush1.msra.mxu0 %v832
    %834 = vmatprep.subr.mxu0 0.0
    %v835 = vand.u32 %v662, 4294901760
    %v836 = vsub.f32 %v662, %v835
    %v837 = vand.u32 %v836, 4294901760
    %v838 = vsub.f32 %v836, %v837
    %v839 = vand.u32 %v838, 4294901760
    %840 = vmatpush1.msra.mxu0 %v839
    %841 = vmatprep.subr.mxu0 0.0
    %842 = vmatpush1.msra.mxu0 0.0
    %843 = vmatprep.subr.mxu0 0.0
    %844 = vmatpush1.msra.mxu0 0.0
    %845 = vmatprep.subr.mxu0 0.0
    %846 = vmatpush1.msra.mxu0 0.0
    %847 = vmatprep.subr.mxu0 0.0
    %848 = vmatpush1.msra.mxu0 0.0
    %849 = vmatprep.subr.mxu0 0.0
    %850 = vmatpush1.msra.mxu0 0.0
    %851 = vmatprep.subr.mxu0 0.0
    %852 = vmatpush1.msra.mxu0 0.0
    %853 = vmatprep.subr.mxu0 0.0
    %854 = vmatpush1.msra.mxu0 0.0
    %855 = vmatprep.subr.mxu0 0.0
    %856 = vmatpush1.msra.mxu0 0.0
    %857 = vmatprep.subr.mxu0 0.0
    %858 = vmatpush1.msra.mxu0 0.0
    %859 = vmatprep.subr.mxu0 0.0
    %860 = vmatpush1.msra.mxu0 0.0
    %861 = vmatprep.subr.mxu0 0.0
    %862 = vmatpush1.msra.mxu0 0.0
    %863 = vmatprep.subr.mxu0 0.0
    %864 = vmatpush1.msra.mxu0 0.0
    %865 = vmatprep.subr.mxu0 0.0
    %866 = vmatpush1.msra.mxu0 0.0
    %867 = vmatprep.subr.mxu0 0.0
    %868 = vmatpush1.msra.mxu0 0.0
    %869 = vmatprep.subr.mxu0 0.0
    %870 = vmatpush1.msra.mxu0 0.0
    %871 = vmatprep.subr.mxu0 0.0
    %872 = vmatpush1.msra.mxu0 0.0
    %873 = vmatprep.subr.mxu0 0.0
    %874 = vmatpush1.msra.mxu0 0.0
    %875 = vmatprep.subr.mxu0 0.0
    %876 = vmatpush1.msra.mxu0 0.0
    %877 = vmatprep.subr.mxu0 0.0
    %878 = vmatpush1.msra.mxu0 0.0
    %879 = vmatprep.subr.mxu0 0.0
    %880 = vmatpush1.msra.mxu0 0.0
    %881 = vmatprep.subr.mxu0 0.0
    %882 = vmatpush1.msra.mxu0 0.0
    %883 = vmatprep.subr.mxu0 0.0
    %884 = vmatpush1.msra.mxu0 0.0
    %885 = vmatprep.subr.mxu0 0.0
    %886 = vmatpush1.msra.mxu0 0.0
    %887 = vmatprep.subr.mxu0 0.0
    %888 = vmatpush1.msra.mxu0 0.0
    %889 = vmatprep.subr.mxu0 0.0
    %890 = vmatpush1.msra.mxu0 0.0
    %891 = vmatprep.subr.mxu0 0.0
    %892 = vmatpush1.msra.mxu0 0.0
    %893 = vmatprep.subr.mxu0 0.0
    %894 = vmatpush1.msra.mxu0 0.0
    %895 = vmatprep.subr.mxu0 0.0
    %896 = vmatpush1.msra.mxu0 0.0
    %897 = vmatprep.mubr.f32.mxu0 0.0
    %v898 = vand.u32 %v693, 4294901760
    %899 = vmatmul.mubr.f32.gmra.mrb[0].mxu0 %v898
    %v900 = vpop.f32.mrb[0].mxu0
    %v901 = vadd.f32 %v780, %v900
    %v902 = vpop.f32.mrb[0].mxu0
    %903 = vmatprep.mubr.f32.mxu0 0.0
    %v904 = vand.u32 %v696, 4294901760
    %905 = vmatmul.mubr.f32.gmra.mrb[0].mxu0 %v904
    %v906 = vpop.f32.mrb[0].mxu0
    %v907 = vadd.f32 %v790, %v906
    %v908 = vpop.f32.mrb[0].mxu0
    %909 = vmatprep.mubr.f32.mxu0 0.0
    %v910 = vand.u32 %v699, 4294901760
    %911 = vmatmul.mubr.f32.gmra.mrb[0].mxu0 %v910
    %v912 = vpop.f32.mrb[0].mxu0
    %v913 = vadd.f32 %v800, %v912
    %v914 = vpop.f32.mrb[0].mxu0
    %915 = vmatprep.mubr.f32.mxu0 0.0
    %v916 = vand.u32 %v702, 4294901760
    %917 = vmatmul.mubr.f32.gmra.mrb[0].mxu0 %v916
    %v918 = vpop.f32.mrb[0].mxu0
    %v919 = vadd.f32 %v810, %v918
    %v920 = vpop.f32.mrb[0].mxu0
    %921 = vdwg.mxu0
    %922 = vmatprep.subr.mxu0 0.0
    %v923 = vand.u32 %v659, 4294901760
    %v924 = vsub.f32 %v659, %v923
    %925 = vmatpush1.msra.mxu0 %v924
    %926 = vmatprep.subr.mxu0 0.0
    %v927 = vand.u32 %v660, 4294901760
    %v928 = vsub.f32 %v660, %v927
    %929 = vmatpush1.msra.mxu0 %v928
    %930 = vmatprep.subr.mxu0 0.0
    %v931 = vand.u32 %v661, 4294901760
    %v932 = vsub.f32 %v661, %v931
    %933 = vmatpush1.msra.mxu0 %v932
    %934 = vmatprep.subr.mxu0 0.0
    %v935 = vand.u32 %v662, 4294901760
    %v936 = vsub.f32 %v662, %v935
    %937 = vmatpush1.msra.mxu0 %v936
    %938 = vmatprep.subr.mxu0 0.0
    %939 = vmatpush1.msra.mxu0 0.0
    %940 = vmatprep.subr.mxu0 0.0
    %941 = vmatpush1.msra.mxu0 0.0
    %942 = vmatprep.subr.mxu0 0.0
    %943 = vmatpush1.msra.mxu0 0.0
    %944 = vmatprep.subr.mxu0 0.0
    %945 = vmatpush1.msra.mxu0 0.0
    %946 = vmatprep.subr.mxu0 0.0
    %947 = vmatpush1.msra.mxu0 0.0
    %948 = vmatprep.subr.mxu0 0.0
    %949 = vmatpush1.msra.mxu0 0.0
    %950 = vmatprep.subr.mxu0 0.0
    %951 = vmatpush1.msra.mxu0 0.0
    %952 = vmatprep.subr.mxu0 0.0
    %953 = vmatpush1.msra.mxu0 0.0
    %954 = vmatprep.subr.mxu0 0.0
    %955 = vmatpush1.msra.mxu0 0.0
    %956 = vmatprep.subr.mxu0 0.0
    %957 = vmatpush1.msra.mxu0 0.0
    %958 = vmatprep.subr.mxu0 0.0
    %959 = vmatpush1.msra.mxu0 0.0
    %960 = vmatprep.subr.mxu0 0.0
    %961 = vmatpush1.msra.mxu0 0.0
    %962 = vmatprep.subr.mxu0 0.0
    %963 = vmatpush1.msra.mxu0 0.0
    %964 = vmatprep.subr.mxu0 0.0
    %965 = vmatpush1.msra.mxu0 0.0
    %966 = vmatprep.subr.mxu0 0.0
    %967 = vmatpush1.msra.mxu0 0.0
    %968 = vmatprep.subr.mxu0 0.0
    %969 = vmatpush1.msra.mxu0 0.0
    %970 = vmatprep.subr.mxu0 0.0
    %971 = vmatpush1.msra.mxu0 0.0
    %972 = vmatprep.subr.mxu0 0.0
    %973 = vmatpush1.msra.mxu0 0.0
    %974 = vmatprep.subr.mxu0 0.0
    %975 = vmatpush1.msra.mxu0 0.0
    %976 = vmatprep.subr.mxu0 0.0
    %977 = vmatpush1.msra.mxu0 0.0
    %978 = vmatprep.subr.mxu0 0.0
    %979 = vmatpush1.msra.mxu0 0.0
    %980 = vmatprep.subr.mxu0 0.0
    %981 = vmatpush1.msra.mxu0 0.0
    %982 = vmatprep.subr.mxu0 0.0
    %983 = vmatpush1.msra.mxu0 0.0
    %984 = vmatprep.subr.mxu0 0.0
    %985 = vmatpush1.msra.mxu0 0.0
    %986 = vmatprep.subr.mxu0 0.0
    %987 = vmatpush1.msra.mxu0 0.0
    %988 = vmatprep.subr.mxu0 0.0
    %989 = vmatpush1.msra.mxu0 0.0
    %990 = vmatprep.subr.mxu0 0.0
    %991 = vmatpush1.msra.mxu0 0.0
    %992 = vmatprep.subr.mxu0 0.0
    %993 = vmatpush1.msra.mxu0 0.0
    %994 = vmatprep.mubr.f32.mxu0 0.0
    %v995 = vand.u32 %v693, 4294901760
    %v996 = vsub.f32 %v693, %v995
    %997 = vmatmul.mubr.f32.gmra.mrb[0].mxu0 %v996
    %v998 = vpop.f32.mrb[0].mxu0
    %v999 = vadd.f32 %v901, %v998
    %v1000 = vpop.f32.mrb[0].mxu0
    %1001 = vmatprep.mubr.f32.mxu0 0.0
    %v1002 = vand.u32 %v696, 4294901760
    %v1003 = vsub.f32 %v696, %v1002
    %1004 = vmatmul.mubr.f32.gmra.mrb[0].mxu0 %v1003
    %v1005 = vpop.f32.mrb[0].mxu0
    %v1006 = vadd.f32 %v907, %v1005
    %v1007 = vpop.f32.mrb[0].mxu0
    %1008 = vmatprep.mubr.f32.mxu0 0.0
    %v1009 = vand.u32 %v699, 4294901760
    %v1010 = vsub.f32 %v699, %v1009
    %1011 = vmatmul.mubr.f32.gmra.mrb[0].mxu0 %v1010
    %v1012 = vpop.f32.mrb[0].mxu0
    %v1013 = vadd.f32 %v913, %v1012
    %v1014 = vpop.f32.mrb[0].mxu0
    %1015 = vmatprep.mubr.f32.mxu0 0.0
    %v1016 = vand.u32 %v702, 4294901760
    %v1017 = vsub.f32 %v702, %v1016
    %1018 = vmatmul.mubr.f32.gmra.mrb[0].mxu0 %v1017
    %v1019 = vpop.f32.mrb[0].mxu0
    %v1020 = vadd.f32 %v919, %v1019
    %v1021 = vpop.f32.mrb[0].mxu0
    %1022 = vdwg.mxu0
    %1023 = vmatprep.subr.mxu0 0.0
    %v1024 = vand.u32 %v659, 4294901760
    %1025 = vmatpush1.msra.mxu0 %v1024
    %1026 = vmatprep.subr.mxu0 0.0
    %v1027 = vand.u32 %v660, 4294901760
    %1028 = vmatpush1.msra.mxu0 %v1027
    %1029 = vmatprep.subr.mxu0 0.0
    %v1030 = vand.u32 %v661, 4294901760
    %1031 = vmatpush1.msra.mxu0 %v1030
    %1032 = vmatprep.subr.mxu0 0.0
    %v1033 = vand.u32 %v662, 4294901760
    %1034 = vmatpush1.msra.mxu0 %v1033
    %1035 = vmatprep.subr.mxu0 0.0
    %1036 = vmatpush1.msra.mxu0 0.0
    %1037 = vmatprep.subr.mxu0 0.0
    %1038 = vmatpush1.msra.mxu0 0.0
    %1039 = vmatprep.subr.mxu0 0.0
    %1040 = vmatpush1.msra.mxu0 0.0
    %1041 = vmatprep.subr.mxu0 0.0
    %1042 = vmatpush1.msra.mxu0 0.0
    %1043 = vmatprep.subr.mxu0 0.0
    %1044 = vmatpush1.msra.mxu0 0.0
    %1045 = vmatprep.subr.mxu0 0.0
    %1046 = vmatpush1.msra.mxu0 0.0
    %1047 = vmatprep.subr.mxu0 0.0
    %1048 = vmatpush1.msra.mxu0 0.0
    %1049 = vmatprep.subr.mxu0 0.0
    %1050 = vmatpush1.msra.mxu0 0.0
    %1051 = vmatprep.subr.mxu0 0.0
    %1052 = vmatpush1.msra.mxu0 0.0
    %1053 = vmatprep.subr.mxu0 0.0
    %1054 = vmatpush1.msra.mxu0 0.0
    %1055 = vmatprep.subr.mxu0 0.0
    %1056 = vmatpush1.msra.mxu0 0.0
    %1057 = vmatprep.subr.mxu0 0.0
    %1058 = vmatpush1.msra.mxu0 0.0
    %1059 = vmatprep.subr.mxu0 0.0
    %1060 = vmatpush1.msra.mxu0 0.0
    %1061 = vmatprep.subr.mxu0 0.0
    %1062 = vmatpush1.msra.mxu0 0.0
    %1063 = vmatprep.subr.mxu0 0.0
    %1064 = vmatpush1.msra.mxu0 0.0
    %1065 = vmatprep.subr.mxu0 0.0
    %1066 = vmatpush1.msra.mxu0 0.0
    %1067 = vmatprep.subr.mxu0 0.0
    %1068 = vmatpush1.msra.mxu0 0.0
    %1069 = vmatprep.subr.mxu0 0.0
    %1070 = vmatpush1.msra.mxu0 0.0
    %1071 = vmatprep.subr.mxu0 0.0
    %1072 = vmatpush1.msra.mxu0 0.0
    %1073 = vmatprep.subr.mxu0 0.0
    %1074 = vmatpush1.msra.mxu0 0.0
    %1075 = vmatprep.subr.mxu0 0.0
    %1076 = vmatpush1.msra.mxu0 0.0
    %1077 = vmatprep.subr.mxu0 0.0
    %1078 = vmatpush1.msra.mxu0 0.0
    %1079 = vmatprep.subr.mxu0 0.0
    %1080 = vmatpush1.msra.mxu0 0.0
    %1081 = vmatprep.subr.mxu0 0.0
    %1082 = vmatpush1.msra.mxu0 0.0
    %1083 = vmatprep.subr.mxu0 0.0
    %1084 = vmatpush1.msra.mxu0 0.0
    %1085 = vmatprep.subr.mxu0 0.0
    %1086 = vmatpush1.msra.mxu0 0.0
    %1087 = vmatprep.subr.mxu0 0.0
    %1088 = vmatpush1.msra.mxu0 0.0
    %1089 = vmatprep.subr.mxu0 0.0
    %1090 = vmatpush1.msra.mxu0 0.0
    %1091 = vmatprep.mubr.f32.mxu0 0.0
    %v1092 = vand.u32 %v693, 4294901760
    %v1093 = vsub.f32 %v693, %v1092
    %v1094 = vand.u32 %v1093, 4294901760
    %1095 = vmatmul.mubr.f32.gmra.mrb[0].mxu0 %v1094
    %v1096 = vpop.f32.mrb[0].mxu0
    %v1097 = vadd.f32 %v999, %v1096
    %v1098 = vpop.f32.mrb[0].mxu0
    %1099 = vmatprep.mubr.f32.mxu0 0.0
    %v1100 = vand.u32 %v696, 4294901760
    %v1101 = vsub.f32 %v696, %v1100
    %v1102 = vand.u32 %v1101, 4294901760
    %1103 = vmatmul.mubr.f32.gmra.mrb[0].mxu0 %v1102
    %v1104 = vpop.f32.mrb[0].mxu0
    %v1105 = vadd.f32 %v1006, %v1104
    %v1106 = vpop.f32.mrb[0].mxu0
    %1107 = vmatprep.mubr.f32.mxu0 0.0
    %v1108 = vand.u32 %v699, 4294901760
    %v1109 = vsub.f32 %v699, %v1108
    %v1110 = vand.u32 %v1109, 4294901760
    %1111 = vmatmul.mubr.f32.gmra.mrb[0].mxu0 %v1110
    %v1112 = vpop.f32.mrb[0].mxu0
    %v1113 = vadd.f32 %v1013, %v1112
    %v1114 = vpop.f32.mrb[0].mxu0
    %1115 = vmatprep.mubr.f32.mxu0 0.0
    %v1116 = vand.u32 %v702, 4294901760
    %v1117 = vsub.f32 %v702, %v1116
    %v1118 = vand.u32 %v1117, 4294901760
    %1119 = vmatmul.mubr.f32.gmra.mrb[0].mxu0 %v1118
    %v1120 = vpop.f32.mrb[0].mxu0
    %v1121 = vadd.f32 %v1020, %v1120
    %v1122 = vpop.f32.mrb[0].mxu0
    %1123 = vdwg.mxu0
    %1124 = vmatprep.subr.mxu0 0.0
    %v1125 = vand.u32 %v659, 4294901760
    %v1126 = vsub.f32 %v659, %v1125
    %v1127 = vand.u32 %v1126, 4294901760
    %1128 = vmatpush1.msra.mxu0 %v1127
    %1129 = vmatprep.subr.mxu0 0.0
    %v1130 = vand.u32 %v660, 4294901760
    %v1131 = vsub.f32 %v660, %v1130
    %v1132 = vand.u32 %v1131, 4294901760
    %1133 = vmatpush1.msra.mxu0 %v1132
    %1134 = vmatprep.subr.mxu0 0.0
    %v1135 = vand.u32 %v661, 4294901760
    %v1136 = vsub.f32 %v661, %v1135
    %v1137 = vand.u32 %v1136, 4294901760
    %1138 = vmatpush1.msra.mxu0 %v1137
    %1139 = vmatprep.subr.mxu0 0.0
    %v1140 = vand.u32 %v662, 4294901760
    %v1141 = vsub.f32 %v662, %v1140
    %v1142 = vand.u32 %v1141, 4294901760
    %1143 = vmatpush1.msra.mxu0 %v1142
    %1144 = vmatprep.subr.mxu0 0.0
    %1145 = vmatpush1.msra.mxu0 0.0
    %1146 = vmatprep.subr.mxu0 0.0
    %1147 = vmatpush1.msra.mxu0 0.0
    %1148 = vmatprep.subr.mxu0 0.0
    %1149 = vmatpush1.msra.mxu0 0.0
    %1150 = vmatprep.subr.mxu0 0.0
    %1151 = vmatpush1.msra.mxu0 0.0
    %1152 = vmatprep.subr.mxu0 0.0
    %1153 = vmatpush1.msra.mxu0 0.0
    %1154 = vmatprep.subr.mxu0 0.0
    %1155 = vmatpush1.msra.mxu0 0.0
    %1156 = vmatprep.subr.mxu0 0.0
    %1157 = vmatpush1.msra.mxu0 0.0
    %1158 = vmatprep.subr.mxu0 0.0
    %1159 = vmatpush1.msra.mxu0 0.0
    %1160 = vmatprep.subr.mxu0 0.0
    %1161 = vmatpush1.msra.mxu0 0.0
    %1162 = vmatprep.subr.mxu0 0.0
    %1163 = vmatpush1.msra.mxu0 0.0
    %1164 = vmatprep.subr.mxu0 0.0
    %1165 = vmatpush1.msra.mxu0 0.0
    %1166 = vmatprep.subr.mxu0 0.0
    %1167 = vmatpush1.msra.mxu0 0.0
    %1168 = vmatprep.subr.mxu0 0.0
    %1169 = vmatpush1.msra.mxu0 0.0
    %1170 = vmatprep.subr.mxu0 0.0
    %1171 = vmatpush1.msra.mxu0 0.0
    %1172 = vmatprep.subr.mxu0 0.0
    %1173 = vmatpush1.msra.mxu0 0.0
    %1174 = vmatprep.subr.mxu0 0.0
    %1175 = vmatpush1.msra.mxu0 0.0
    %1176 = vmatprep.subr.mxu0 0.0
    %1177 = vmatpush1.msra.mxu0 0.0
    %1178 = vmatprep.subr.mxu0 0.0
    %1179 = vmatpush1.msra.mxu0 0.0
    %1180 = vmatprep.subr.mxu0 0.0
    %1181 = vmatpush1.msra.mxu0 0.0
    %1182 = vmatprep.subr.mxu0 0.0
    %1183 = vmatpush1.msra.mxu0 0.0
    %1184 = vmatprep.subr.mxu0 0.0
    %1185 = vmatpush1.msra.mxu0 0.0
    %1186 = vmatprep.subr.mxu0 0.0
    %1187 = vmatpush1.msra.mxu0 0.0
    %1188 = vmatprep.subr.mxu0 0.0
    %1189 = vmatpush1.msra.mxu0 0.0
    %1190 = vmatprep.subr.mxu0 0.0
    %1191 = vmatpush1.msra.mxu0 0.0
    %1192 = vmatprep.subr.mxu0 0.0
    %1193 = vmatpush1.msra.mxu0 0.0
    %1194 = vmatprep.subr.mxu0 0.0
    %1195 = vmatpush1.msra.mxu0 0.0
    %1196 = vmatprep.subr.mxu0 0.0
    %1197 = vmatpush1.msra.mxu0 0.0
    %1198 = vmatprep.subr.mxu0 0.0
    %1199 = vmatpush1.msra.mxu0 0.0
    %1200 = vmatprep.mubr.f32.mxu0 0.0
    %v1201 = vand.u32 %v693, 4294901760
    %1202 = vmatmul.mubr.f32.gmra.mrb[0].mxu0 %v1201
    %v1203 = vpop.f32.mrb[0].mxu0
    %v1204 = vadd.f32 %v1097, %v1203
    %v1205 = vpop.f32.mrb[0].mxu0
    %1206 = vmatprep.mubr.f32.mxu0 0.0
    %v1207 = vand.u32 %v696, 4294901760
    %1208 = vmatmul.mubr.f32.gmra.mrb[0].mxu0 %v1207
    %v1209 = vpop.f32.mrb[0].mxu0
    %v1210 = vadd.f32 %v1105, %v1209
    %v1211 = vpop.f32.mrb[0].mxu0
    %1212 = vmatprep.mubr.f32.mxu0 0.0
    %v1213 = vand.u32 %v699, 4294901760
    %1214 = vmatmul.mubr.f32.gmra.mrb[0].mxu0 %v1213
    %v1215 = vpop.f32.mrb[0].mxu0
    %v1216 = vadd.f32 %v1113, %v1215
    %v1217 = vpop.f32.mrb[0].mxu0
    %1218 = vmatprep.mubr.f32.mxu0 0.0
    %v1219 = vand.u32 %v702, 4294901760
    %1220 = vmatmul.mubr.f32.gmra.mrb[0].mxu0 %v1219
    %v1221 = vpop.f32.mrb[0].mxu0
    %v1222 = vadd.f32 %v1121, %v1221
    %v1223 = vpop.f32.mrb[0].mxu0
    %1224 = vdwg.mxu0
    %1225 = vmatprep.subr.mxu0 0.0
    %v1226 = vand.u32 %v659, 4294901760
    %1227 = vmatpush1.msra.mxu0 %v1226
    %1228 = vmatprep.subr.mxu0 0.0
    %v1229 = vand.u32 %v660, 4294901760
    %1230 = vmatpush1.msra.mxu0 %v1229
    %1231 = vmatprep.subr.mxu0 0.0
    %v1232 = vand.u32 %v661, 4294901760
    %1233 = vmatpush1.msra.mxu0 %v1232
    %1234 = vmatprep.subr.mxu0 0.0
    %v1235 = vand.u32 %v662, 4294901760
    %1236 = vmatpush1.msra.mxu0 %v1235
    %1237 = vmatprep.subr.mxu0 0.0
    %1238 = vmatpush1.msra.mxu0 0.0
    %1239 = vmatprep.subr.mxu0 0.0
    %1240 = vmatpush1.msra.mxu0 0.0
    %1241 = vmatprep.subr.mxu0 0.0
    %1242 = vmatpush1.msra.mxu0 0.0
    %1243 = vmatprep.subr.mxu0 0.0
    %1244 = vmatpush1.msra.mxu0 0.0
    %1245 = vmatprep.subr.mxu0 0.0
    %1246 = vmatpush1.msra.mxu0 0.0
    %1247 = vmatprep.subr.mxu0 0.0
    %1248 = vmatpush1.msra.mxu0 0.0
    %1249 = vmatprep.subr.mxu0 0.0
    %1250 = vmatpush1.msra.mxu0 0.0
    %1251 = vmatprep.subr.mxu0 0.0
    %1252 = vmatpush1.msra.mxu0 0.0
    %1253 = vmatprep.subr.mxu0 0.0
    %1254 = vmatpush1.msra.mxu0 0.0
    %1255 = vmatprep.subr.mxu0 0.0
    %1256 = vmatpush1.msra.mxu0 0.0
    %1257 = vmatprep.subr.mxu0 0.0
    %1258 = vmatpush1.msra.mxu0 0.0
    %1259 = vmatprep.subr.mxu0 0.0
    %1260 = vmatpush1.msra.mxu0 0.0
    %1261 = vmatprep.subr.mxu0 0.0
    %1262 = vmatpush1.msra.mxu0 0.0
    %1263 = vmatprep.subr.mxu0 0.0
    %1264 = vmatpush1.msra.mxu0 0.0
    %1265 = vmatprep.subr.mxu0 0.0
    %1266 = vmatpush1.msra.mxu0 0.0
    %1267 = vmatprep.subr.mxu0 0.0
    %1268 = vmatpush1.msra.mxu0 0.0
    %1269 = vmatprep.subr.mxu0 0.0
    %1270 = vmatpush1.msra.mxu0 0.0
    %1271 = vmatprep.subr.mxu0 0.0
    %1272 = vmatpush1.msra.mxu0 0.0
    %1273 = vmatprep.subr.mxu0 0.0
    %1274 = vmatpush1.msra.mxu0 0.0
    %1275 = vmatprep.subr.mxu0 0.0
    %1276 = vmatpush1.msra.mxu0 0.0
    %1277 = vmatprep.subr.mxu0 0.0
    %1278 = vmatpush1.msra.mxu0 0.0
    %1279 = vmatprep.subr.mxu0 0.0
    %1280 = vmatpush1.msra.mxu0 0.0
    %1281 = vmatprep.subr.mxu0 0.0
    %1282 = vmatpush1.msra.mxu0 0.0
    %1283 = vmatprep.subr.mxu0 0.0
    %1284 = vmatpush1.msra.mxu0 0.0
    %1285 = vmatprep.subr.mxu0 0.0
    %1286 = vmatpush1.msra.mxu0 0.0
    %1287 = vmatprep.subr.mxu0 0.0
    %1288 = vmatpush1.msra.mxu0 0.0
    %1289 = vmatprep.subr.mxu0 0.0
    %1290 = vmatpush1.msra.mxu0 0.0
    %1291 = vmatprep.subr.mxu0 0.0
    %1292 = vmatpush1.msra.mxu0 0.0
    %1293 = vmatprep.mubr.f32.mxu0 0.0
    %v1294 = vand.u32 %v693, 4294901760
    %1295 = vmatmul.mubr.f32.gmra.mrb[0].mxu0 %v1294
    %v1296 = vpop.f32.mrb[0].mxu0
    %v1297 = vadd.f32 %v1204, %v1296
    %v1298 = vpop.f32.mrb[0].mxu0
    %1299 = vmatprep.mubr.f32.mxu0 0.0
    %v1300 = vand.u32 %v696, 4294901760
    %1301 = vmatmul.mubr.f32.gmra.mrb[0].mxu0 %v1300
    %v1302 = vpop.f32.mrb[0].mxu0
    %v1303 = vadd.f32 %v1210, %v1302
    %v1304 = vpop.f32.mrb[0].mxu0
    %1305 = vmatprep.mubr.f32.mxu0 0.0
    %v1306 = vand.u32 %v699, 4294901760
    %1307 = vmatmul.mubr.f32.gmra.mrb[0].mxu0 %v1306
    %v1308 = vpop.f32.mrb[0].mxu0
    %v1309 = vadd.f32 %v1216, %v1308
    %v1310 = vpop.f32.mrb[0].mxu0
    %1311 = vmatprep.mubr.f32.mxu0 0.0
    %v1312 = vand.u32 %v702, 4294901760
    %1313 = vmatmul.mubr.f32.gmra.mrb[0].mxu0 %v1312
    %v1314 = vpop.f32.mrb[0].mxu0
    %v1315 = vadd.f32 %v1222, %v1314
    %v1316 = vpop.f32.mrb[0].mxu0
    %1317 = vdwg.mxu0
    %v1318 = vtanh.pop %v1297
    %v1319 = vtanh.pop %v1303
    %v1320 = vtanh.pop %v1309
    %v1321 = vtanh.pop %v1315
    %v1322 = vld [vmem:[%s5] sm:$0xff]
    %v1323 = vld [vmem:[%s5 + $0x8] sm:$0xff]
    %v1324 = vld [vmem:[%s5 + $0x10] sm:$0xff]
    %v1325 = vld [vmem:[%s5 + $0x18] sm:$0xff]
    %1327 = vset.pattern.permute.xlu0 0
    %1328 = vperm.xlu0 %1327, %v1322
    %v1329 = vpop.permute.xlu0 %1328
    %1332 = vset.pattern.permute.xlu0 0
    %1333 = vperm.xlu0 %1332, %v1323
    %v1334 = vpop.permute.xlu0 %1333
    %1337 = vset.pattern.permute.xlu0 0
    %1338 = vperm.xlu0 %1337, %v1324
    %v1339 = vpop.permute.xlu0 %1338
    %1342 = vset.pattern.permute.xlu0 0
    %1343 = vperm.xlu0 %1342, %v1325
    %v1344 = vpop.permute.xlu0 %1343
    %v1346 = vmul.f32 %v1329, %v1318
    %v1347 = vmul.f32 %v1334, %v1319
    %v1348 = vmul.f32 %v1339, %v1320
    %v1349 = vmul.f32 %v1344, %v1321
    %v1350 = vsel %vm58, %v1346, 0.0
    %v1351 = vsel %vm58, %v1347, 0.0
    %v1352 = vadd.f32 %v1350, %v1351
    %v1353 = vsel %vm58, %v1348, 0.0
    %v1354 = vadd.f32 %v1352, %v1353
    %v1355 = vsel %vm58, %v1349, 0.0
    %v1356 = vadd.f32 %v1354, %v1355
    %v1357 = vrot.slane %v1356, 4
    %v1358 = vadd.f32 %v1356, %v1357
    %v1359 = vrot.slane %v1358, 2
    %v1360 = vadd.f32 %v1358, %v1359
    %v1361 = vrot.slane %v1360, 1
    %v1362 = vadd.f32 %v1360, %v1361
    %s1363 = sld [smem:[#allocation2]]
    %v1364 = vstv %s1363
    %v1365 = vadd.f32 %v1362, %v1364
    %vm1366 = vcmask 122880
    %1367 = vst.msk [vmem:[#allocation3] sm:$0x1] %vm1366, %v1365
    // Predicated region
    $region30: #{tpu_custom_call.1} parent=1 // pred_check
      _
    $region31: #{tpu_custom_call.1} parent=1 // pred_check_branch
      %1369 = sbr.rel (0) target = $region33
    $region32: #{tpu_custom_call.1} parent=1 // pred_region
      %s1371 = ssub.s32 16, 16
      %1372 = vsyncadd [#allocation4], %s1371
      %s1374 = sshll.u32 [#allocation3], 4
      %s1375 = int_to_ptr.vmem [resolvable:$true] %s1374
      %1377 = dma.vmem_to_hbm [thread:$0]  %s1375, 16, %s7, [#allocation4]
    $region33: #{tpu_custom_call.1} parent=1 // pred_fallthru
      _
    // Predicated region
    $region34: #{tpu_custom_call.1} parent=1 // pred_check
      _
    $region35: #{tpu_custom_call.1} parent=1 // pred_check_branch
      %1379 = sbr.rel (0) target = $region37
    $region36: #{tpu_custom_call.1} parent=1 // pred_region
      %1380 = dma.done [#allocation4], 16
    $region37: #{tpu_custom_call.1} parent=1 // pred_fallthru
      _
    %1381 = vsyncpa [#allocation4], 1

</llo_original>
